<compile_context>
chip_gen: v6e
topology: v6e:2x2x1
jax: 0.10.0
libtpu: 0.0.40
codegen_flags: <defaults>
</compile_context>

<pallas_src>
import math

import jax
import jax.numpy as jnp
from jax.experimental import pallas as pl
from jax.experimental.pallas import tpu as pltpu


# --------------------------------------------------------------------------
# Tuning constants (v5e / v6e / v7x):
#   _LIVE_VMEM_BUDGET_BYTES : live footprint target for all double-buffered
#                             blocks (x in + out + f32 PE window) -> ~4 MiB x
#                             blocks for f32, leaving headroom under the limit.
#   _VMEM_LIMIT_BYTES       : explicit scoped-VMEM limit.  Raises v5e's 16 MiB
#                             default, equals v6e/v7x defaults, and stays at
#                             half of v7x's 64 MiB physical VMEM.
#   _MIN_SPLIT_BYTES        : only force a >=2-step grid (for v7x's 2 TCs)
#                             when the stream is big enough that the extra
#                             ~0.35 us grid step is irrelevant.
# --------------------------------------------------------------------------
_LIVE_VMEM_BUDGET_BYTES = 24 * 1024 * 1024
_VMEM_LIMIT_BYTES = 32 * 1024 * 1024
_MIN_SPLIT_BYTES = 2 * 1024 * 1024


def make_position_embeddings(dim: int, max_length: int = 200) -> jnp.ndarray:
    """Deterministic f32 sinusoidal table, matching the PyTorch __init__ exactly."""
    if dim % 2 != 0:
        raise ValueError(f"PositionEncodings requires an even dim, got {dim}")
    positions = jnp.arange(max_length, dtype=jnp.float32)[:, None]          # (L, 1)
    frequencies = jnp.exp(
        jnp.arange(0, dim, 2, dtype=jnp.float32) * math.log(10000.0) / dim
    )                                                                        # (D/2,)
    emb = jnp.zeros((max_length, dim), dtype=jnp.float32)
    emb = emb.at[:, 0::2].set(jnp.sin(positions / frequencies))
    emb = emb.at[:, 1::2].set(jnp.cos(positions / frequencies))
    return emb                                                               # (L, D)


# --------------------------------------------------------------------------
# Kernels.  The add is done in f32 (PyTorch keeps the buffer in f32) and the
# result is cast back to x.dtype; both casts are free VPU work here.
# --------------------------------------------------------------------------
def _add_pe_flat_kernel(x_ref, emb_ref, o_ref):
    # x_ref/o_ref: (tb, tc) in x.dtype; emb_ref: (1, tc) f32 PE window,
    # broadcast over the tb rows by the VPU add.
    o_ref[...] = (x_ref[...].astype(jnp.float32) + emb_ref[...]).astype(o_ref.dtype)


def _add_pe_rows_kernel(x_ref, emb_ref, o_ref):
    # x_ref/o_ref: (1, ts, td) in x.dtype; emb_ref: (ts, td) f32 PE tile.
    o_ref[...] = (
        x_ref[...].astype(jnp.float32) + emb_ref[...][None, :, :]
    ).astype(o_ref.dtype)


# --------------------------------------------------------------------------
# Tile selection.
# --------------------------------------------------------------------------
def _sublane_pack(itemsize: int) -> int:
    # Native packed sublane tile: 8 for f32, 16 for bf16, 32 for int8/fp8.
    return 8 * max(1, 4 // itemsize)


def _pick_tiles_flat(B: int, N: int, itemsize: int) -> tuple[int, int]:
    pack = _sublane_pack(itemsize)
    tb = B if B <= pack else pack
    # Live VMEM bytes per lane-column of one block:
    #   2x x-in + 2x out (x.dtype, tb sublanes) + 2x f32 PE window (padded to
    #   8 sublanes).
    per_col_bytes = 4 * tb * itemsize + 2 * 8 * 4
    col_budget = max(128, _LIVE_VMEM_BUDGET_BYTES // per_col_bytes)
    if N <= col_budget:
        tc = N                               # full extent
    else:
        tc = (col_budget // 128) * 128       # 128-aligned; ragged tail masked
    # v7x has 2 TensorCores: make sure a large single-tile stream still yields
    # >= 2 parallel grid steps (harmless elsewhere).
    if tb >= B and tc >= N and B * N * itemsize >= _MIN_SPLIT_BYTES and N >= 256:
        tc = ((N // 2 + 127) // 128) * 128
    return tb, tc


def _pick_tiles_rows(B: int, S: int, D: int, itemsize: int) -> tuple[int, int]:
    pack = _sublane_pack(itemsize)
    # Live VMEM bytes per block element: 2x x-in + 2x out (x.dtype) + 2x f32 PE.
    elem_budget = max(8 * 128, _LIVE_VMEM_BUDGET_BYTES // (4 * itemsize + 8))
    td = D
    if td * pack > elem_budget:
        td = max(128, (elem_budget // pack // 128) * 128)
    row_budget = max(8, elem_budget // td)
    base = min(S, row_budget)
    ts = (base // pack) * pack
    if ts == 0:
        ts = (base // 8) * 8                 # fall back to the 8-row minimum
    ts = max(ts, 8)
    # v7x dual-TC: split a big single-tile (B == 1) case into >= 2 grid steps.
    if B == 1 and ts >= S and td >= D and S * D * itemsize >= _MIN_SPLIT_BYTES:
        if D >= 256:
            td = ((D // 2 + 127) // 128) * 128
        elif S >= 2 * pack:
            ts = ((S // 2 + pack - 1) // pack) * pack
    return ts, td


# --------------------------------------------------------------------------
# Forward wrappers.
# --------------------------------------------------------------------------
def _compiler_params(n_axes: int) -> pltpu.CompilerParams:
    return pltpu.CompilerParams(
        dimension_semantics=("parallel",) * n_axes,
        vmem_limit_bytes=_VMEM_LIMIT_BYTES,
    )


def _forward_flat(x: jnp.ndarray, emb_flat: jnp.ndarray, donate_x: bool) -> jnp.ndarray:
    """Lane-dense path: (B, S, D) -> (B, N=S*D); PE read from the flat table."""
    B, S, D = x.shape
    N = S * D
    itemsize = jnp.dtype(x.dtype).itemsize
    x2 = x.reshape(B, N)                     # free: contiguous row-major

    tb, tc = _pick_tiles_flat(B, N, itemsize)
    nrows, ncols = pl.cdiv(B, tb), pl.cdiv(N, tc)

    cost = pl.CostEstimate(
        flops=B * N,
        transcendentals=0,
        bytes_accessed=2 * B * N * itemsize + N * 4,   # PE slab fetched once per column
    )

    out2 = pl.pallas_call(
        _add_pe_flat_kernel,
        out_shape=jax.ShapeDtypeStruct((B, N), x.dtype),
        grid_spec=pltpu.PrefetchScalarGridSpec(
            num_scalar_prefetch=0,
            # Columns outer, batch-rows inner: the PE block index (0, j) is
            # constant across the inner axis, so Pallas skips its re-DMA.
            grid=(ncols, nrows),
            in_specs=[
                pl.BlockSpec((tb, tc), lambda j, i: (i, j)),   # x tile
                pl.BlockSpec((1, tc), lambda j, i: (0, j)),    # f32 PE window
            ],
            out_specs=pl.BlockSpec((tb, tc), lambda j, i: (i, j)),
        ),
        compiler_params=_compiler_params(2),
        cost_estimate=cost,
        input_output_aliases=({0: 0} if donate_x else {}),
    )(x2, emb_flat)

    return out2.reshape(B, S, D)


def _forward_rows(x: jnp.ndarray, emb_table: jnp.ndarray, donate_x: bool) -> jnp.ndarray:
    """D % 128 == 0 path: keep (B, S, D); PE tiled along rows of the table."""
    B, S, D = x.shape
    itemsize = jnp.dtype(x.dtype).itemsize
    ts, td = _pick_tiles_rows(B, S, D, itemsize)
    ns, nd = pl.cdiv(S, ts), pl.cdiv(D, td)

    cost = pl.CostEstimate(
        flops=B * S * D,
        transcendentals=0,
        bytes_accessed=2 * B * S * D * itemsize + S * D * 4,
    )

    return pl.pallas_call(
        _add_pe_rows_kernel,
        out_shape=jax.ShapeDtypeStruct((B, S, D), x.dtype),
        grid_spec=pltpu.PrefetchScalarGridSpec(
            num_scalar_prefetch=0,
            # Batch innermost: the PE block index (s, d) is constant across it,
            # so the PE tile is not re-fetched per batch element.
            grid=(nd, ns, B),
            in_specs=[
                pl.BlockSpec((1, ts, td), lambda d, s, b: (b, s, d)),   # x tile
                pl.BlockSpec((ts, td), lambda d, s, b: (s, d)),         # f32 PE tile
            ],
            out_specs=pl.BlockSpec((1, ts, td), lambda d, s, b: (b, s, d)),
        ),
        compiler_params=_compiler_params(3),
        cost_estimate=cost,
        input_output_aliases=({0: 0} if donate_x else {}),
    )(x, emb_table)


def position_encodings_forward(
    x: jnp.ndarray,
    emb_table: jnp.ndarray,
    emb_flat: jnp.ndarray | None = None,
    donate_x: bool = False,
) -> jnp.ndarray:
    """x: (B, S, D); emb_table: (max_length, D) f32. Returns x + PE[:S] in x.dtype."""
    B, S, D = x.shape
    max_length, dim = emb_table.shape
    if S > max_length:
        raise ValueError(f"sequence length {S} exceeds max_length {max_length}")
    if D != dim:
        raise ValueError(f"feature dim mismatch: x has {D}, table has {dim}")
    if emb_table.dtype != jnp.float32:
        emb_table = emb_table.astype(jnp.float32)

    if D % 128 == 0 and S >= 8:
        # Lane-wide hidden dims: naturally lane-dense tiles, no 1-row broadcast slab.
        return _forward_rows(x, emb_table, donate_x)

    # Lane-narrow D: flatten (S, D) -> N for unmasked, lane-dense stores.  The
    # flat table view's first S*D columns are exactly PE[:S].reshape(-1), so no
    # per-call slice/cast of the table is needed.
    if emb_flat is None:
        emb_flat = emb_table.reshape(1, max_length * D)
    elif emb_flat.dtype != jnp.float32:
        emb_flat = emb_flat.astype(jnp.float32)
    return _forward_flat(x, emb_flat, donate_x)


class PositionEncodings:
    """JAX/Pallas port of the PyTorch module; table built once at init (f32)."""

    def __init__(self, dim: int, max_length: int = 200) -> None:
        self.dim = dim
        self.max_length = max_length
        self.embeddings = make_position_embeddings(dim, max_length)          # (L, D) f32
        # Pre-flattened view for the lane-dense path (hoisted out of forward).
        self.embeddings_flat = self.embeddings.reshape(1, max_length * dim)  # (1, L*D)

    def __call__(self, x: jnp.ndarray, donate_x: bool = False) -> jnp.ndarray:
        return position_encodings_forward(
            x, self.embeddings, self.embeddings_flat, donate_x=donate_x
        )


if __name__ == "__main__":
    MAX_LENGTH = 200
    key = jax.random.PRNGKey(0)

    def _check(b, s, d, dtype):
        pe = PositionEncodings(d, MAX_LENGTH)
        xk = jax.random.fold_in(key, b * 100000 + s * 1000 + d)
        x = jax.random.normal(xk, (b, s, d), dtype=jnp.float32).astype(dtype)
        out = jax.block_until_ready(pe(x))
        ref = (x.astype(jnp.float32) + pe.embeddings[None, :s, :]).astype(dtype)
        assert out.shape == (b, s, d)
        assert out.dtype == jnp.dtype(dtype)
        tol = 1e-6 if dtype == jnp.float32 else 1e-2
        ok = jnp.allclose(out.astype(jnp.float32), ref.astype(jnp.float32),
                          atol=tol, rtol=tol)
        assert bool(ok), f"mismatch for shape ({b},{s},{d}) dtype {dtype}"

    # Primary demo shape (batch=2, seq=8, hidden=32), f32 — lane-dense flatten path.
    _check(2, 8, 32, jnp.float32)
    # Lane-wide hidden dim (D % 128 == 0) — (B, S, D) row-tiled path.
    _check(2, 8, 128, jnp.float32)
    # bf16 activations: in-kernel f32 add (PyTorch-parity), output cast back to bf16.
    _check(2, 8, 32, jnp.bfloat16)
    # Ragged batch tile (B=10 with 8-row tiles) exercises BlockSpec edge masking.
    _check(10, 8, 32, jnp.float32)

    print("KERNEL_OK")
</pallas_src>

<mosaic_0001>
module attributes {stable_mosaic.version = 11 : i64} {
  func.func @_add_pe_flat_kernel(%arg0: i32, %arg1: i32, %arg2: memref<2x256xf32, #tpu.memory_space<vmem>>, %arg3: memref<1x256xf32, #tpu.memory_space<vmem>>, %arg4: memref<2x256xf32, #tpu.memory_space<vmem>>) attributes {dimension_semantics = [#tpu.dimension_semantics<parallel>, #tpu.dimension_semantics<parallel>], iteration_bounds = array<i64: 1, 1>, scalar_prefetch = 0 : i64, scratch_operands = 0 : i64, tpu.core_type = #tpu.core_type<tc>, window_params = [{transform_indices = @transform_0, window_bounds = array<i64: 2, 256>}, {transform_indices = @transform_1, window_bounds = array<i64: 1, 256>}, {transform_indices = @transform_2, window_bounds = array<i64: 2, 256>}]} {
    %c0 = arith.constant 0 : index
    %c0_0 = arith.constant 0 : index
    %0 = vector.load %arg2[%c0, %c0_0] : memref<2x256xf32, #tpu.memory_space<vmem>>, vector<2x256xf32>
    %c0_1 = arith.constant 0 : index
    %c0_2 = arith.constant 0 : index
    %1 = vector.load %arg3[%c0_1, %c0_2] : memref<1x256xf32, #tpu.memory_space<vmem>>, vector<1x256xf32>
    %2 = vector.broadcast %1 : vector<1x256xf32> to vector<2x256xf32>
    %3 = arith.addf %0, %2 : vector<2x256xf32>
    %c0_3 = arith.constant 0 : index
    %c0_4 = arith.constant 0 : index
    %4 = vector.load %arg4[%c0_3, %c0_4] : memref<2x256xf32, #tpu.memory_space<vmem>>, vector<2x256xf32>
    tpu.vector_store %arg4[%c0_3, %c0_4], %3 {strides = array<i32>} : memref<2x256xf32, #tpu.memory_space<vmem>>, vector<2x256xf32>,
    return
  }
  func.func @transform_0(%arg0: i32, %arg1: i32) -> (i32, i32) {
    %c0_i32 = arith.constant 0 : i32
    return %arg1, %arg0 : i32, i32
  }
  func.func @transform_1(%arg0: i32, %arg1: i32) -> (i32, i32) {
    %c0_i32 = arith.constant 0 : i32
    %c0_i32_0 = arith.constant 0 : i32
    return %c0_i32, %arg0 : i32, i32
  }
  func.func @transform_2(%arg0: i32, %arg1: i32) -> (i32, i32) {
    %c0_i32 = arith.constant 0 : i32
    return %arg1, %arg0 : i32, i32
  }
}

</mosaic_0001>

<llo_original>
// kernel: tpu_custom_call.1
$region0: #{tpu_custom_call.1}
  #allocation0 [shape = 'u32[]', space=smem, size = 0x4, offset = 0x4, fixed_abs, tag = 'smem constant byte address 0x4 - core index']
  #allocation1 [shape = 'u32[144,128]{1,0:T(1,128)}', space=vmem, size = 0x12000, scoped, tag = 'internal scratch']
  %s0 = inlined_call_operand.hbm [shape: f32[2,256], index: 0, kind: input, shape index: {}]
  %s1 = inlined_call_operand.hbm [shape: f32[1,6400], index: 1, kind: input, shape index: {}]
  %s2 = inlined_call_operand.hbm [shape: f32[2,256], index: 2, kind: output, shape index: {}]
  %s3 = sld [smem:[#allocation0]]
  $region26: #{tpu_custom_call.1} parent=0
    _
  %s5 = ssub.s32 1, %s3
  %s6 = scalar_select 0, %s5, %s3
  $region1: #{tpu_custom_call.1} parent=0
    #allocation2 [shape = 'u8[2048]{0}', space=vmem, size = 0x800, scoped, tag = 'input window, operand 0, single buffered']
    #allocation3 [shape = 's32[1]{0}', space=sflag, size = 0x4, scoped, tag = 'scoped memory for tpu_custom_call.1']
    #allocation4 [shape = 's32[1]{0}', space=sflag, size = 0x4, scoped, tag = 'scoped memory for tpu_custom_call.1']
    #allocation5 [shape = 'u8[1024]{0}', space=vmem, size = 0x400, scoped, tag = 'input window, operand 1, single buffered']
    #allocation6 [shape = 's32[1]{0}', space=sflag, size = 0x4, scoped, tag = 'scoped memory for tpu_custom_call.1']
    #allocation7 [shape = 'u8[2048]{0}', space=vmem, size = 0x800, scoped, tag = 'output window, operand 0, single buffered']
    %7 = vsyncpa [#allocation3], 0
    %8 = vsyncpa [#allocation6], 0
    %9 = vsyncpa [#allocation4], 0
    // Predicated region
    $region2: #{tpu_custom_call.1} parent=1 // pred_check
      _
    $region3: #{tpu_custom_call.1} parent=1 // pred_check_branch
      %11 = sbr.rel (0) target = $region5
    $region4: #{tpu_custom_call.1} parent=1 // pred_region
      %s13 = ssub.s32 64, 64
      %14 = vsyncadd [#allocation3], %s13
      %s16 = sshll.u32 [#allocation2], 4
      %s17 = int_to_ptr.vmem [resolvable:$true] %s16
      %19 = dma.hbm_to_vmem [thread:$0]  %s0, 64, %s17, [#allocation3]
    $region5: #{tpu_custom_call.1} parent=1 // pred_fallthru
      _
    // Predicated region
    $region6: #{tpu_custom_call.1} parent=1 // pred_check
      _
    $region7: #{tpu_custom_call.1} parent=1 // pred_check_branch
      %21 = sbr.rel (0) target = $region9
    $region8: #{tpu_custom_call.1} parent=1 // pred_region
      %s23 = ssub.s32 32, 32
      %24 = vsyncadd [#allocation6], %s23
      %s26 = sshll.u32 [#allocation5], 4
      %s27 = int_to_ptr.vmem [resolvable:$true] %s26
      %29 = dma.hbm_to_vmem [thread:$0]  %s1, 32, %s27, [#allocation6]
    $region9: #{tpu_custom_call.1} parent=1 // pred_fallthru
      _
    // Predicated region
    $region10: #{tpu_custom_call.1} parent=1 // pred_check
      _
    $region11: #{tpu_custom_call.1} parent=1 // pred_check_branch
      %31 = sbr.rel (0) target = $region13
    $region12: #{tpu_custom_call.1} parent=1 // pred_region
      %32 = dma.done [#allocation3], 64
    $region13: #{tpu_custom_call.1} parent=1 // pred_fallthru
      _
    // Predicated region
    $region14: #{tpu_custom_call.1} parent=1 // pred_check
      _
    $region15: #{tpu_custom_call.1} parent=1 // pred_check_branch
      %34 = sbr.rel (0) target = $region17
    $region16: #{tpu_custom_call.1} parent=1 // pred_region
      %35 = dma.done [#allocation6], 32
    $region17: #{tpu_custom_call.1} parent=1 // pred_fallthru
      _
    %v36 = vld [vmem:[#allocation2] sm:$0xf]
    %v37 = vld [vmem:[#allocation5] sm:$0x3]
    %v39 = vlaneseq
    %v40 = vshrl.u32 %v39, 7
    %v41 = vsub.s32 0, %v40
    %v42 = vrot.slane %v37, %v41
    %v43 = vlaneseq
    %v44 = vshrl.u32 %v43, 7
    %v45 = vsub.s32 1, %v44
    %v46 = vrot.slane %v37, %v45
    %v47 = vcombine.low %v42, %v46
    %v49 = vunpack.c.l.s4 1983009808
    %v50 = vunpack.c.0.s8 %v49
    %v51 = vlaneseq
    %v52 = vshrl.u32 %v51, 7
    %v53 = vsub.s32 %v50, %v52
    %v54 = vrot.slane %v47, %v53
    %v56 = vadd.f32 %v36, %v54
    %57 = vst [vmem:[#allocation7] sm:$0xf] %v56
    // Predicated region
    $region18: #{tpu_custom_call.1} parent=1 // pred_check
      _
    $region19: #{tpu_custom_call.1} parent=1 // pred_check_branch
      %59 = sbr.rel (0) target = $region21
    $region20: #{tpu_custom_call.1} parent=1 // pred_region
      %s61 = ssub.s32 64, 64
      %62 = vsyncadd [#allocation4], %s61
      %s64 = sshll.u32 [#allocation7], 4
      %s65 = int_to_ptr.vmem [resolvable:$true] %s64
      %67 = dma.vmem_to_hbm [thread:$0]  %s65, 64, %s2, [#allocation4]
    $region21: #{tpu_custom_call.1} parent=1 // pred_fallthru
      _
    // Predicated region
    $region22: #{tpu_custom_call.1} parent=1 // pred_check
      _
    $region23: #{tpu_custom_call.1} parent=1 // pred_check_branch
      %69 = sbr.rel (0) target = $region25
    $region24: #{tpu_custom_call.1} parent=1 // pred_region
      %70 = dma.done [#allocation4], 64
    $region25: #{tpu_custom_call.1} parent=1 // pred_fallthru
      _
    %71 = vsyncpa [#allocation3], 1
    %72 = vsyncpa [#allocation6], 1
    %73 = vsyncpa [#allocation4], 1

</llo_original>
